<compile_context>
chip_gen: v7x
topology: tpu7x:2x2x1
jax: 0.10.0
libtpu: 0.0.40
codegen_flags: <defaults>
</compile_context>

<pallas_src>
import math
import functools
from typing import NamedTuple

import jax
import jax.numpy as jnp
from jax import lax
from jax.experimental import pallas as pl
from jax.experimental.pallas import tpu as pltpu


def _round_up(v, m):
    return (v + m - 1) // m * m


def _balanced_tile(dim, cap, align):
    """Largest tile <= cap, multiple of `align`, splitting dim near-evenly
    (avoids a nearly-empty trailing tile that re-streams the weights)."""
    dim_a = _round_up(dim, align)
    if dim_a <= cap:
        return dim_a
    n_tiles = -(-dim_a // cap)                     # ceil
    return _round_up(-(-dim_a // n_tiles), align)  # <= cap since cap % align == 0


def _pad2(a, rows, cols):
    pr, pc = rows - a.shape[0], cols - a.shape[1]
    if pr or pc:
        a = jnp.pad(a, ((0, pr), (0, pc)))
    return a


# ------------------------------------------------------------------ kernels

def _noisy_linear_kernel(x_ref, wmu_ref, wsig_ref, weps_ref,
                         bmu_ref, bsig_ref, beps_ref, o_ref, acc_ref):
    """Training-mode tile: w = mu + sigma*eps built on the fly (bf16 VPU
    combine, overlaps the MXU / DMA), K-accumulated in f32."""
    k = pl.program_id(2)

    @pl.when(k == 0)
    def _():
        acc_ref[...] = jnp.zeros_like(acc_ref)

    # Noisy weight tile [tn, tk], bf16.  (On v5e Mosaic lowers the bf16
    # elementwise ops through f32 automatically; hidden under DMA.)
    w = wmu_ref[...] + wsig_ref[...] * weps_ref[...]
    # Contract the last dims: x [tm, tk] x w [tn, tk] -> [tm, tn] on the MXU,
    # bf16 operands, f32 accumulation.  No w.T / XLU pass.
    acc_ref[...] += lax.dot_general(
        x_ref[...], w,
        dimension_numbers=(((1,), (1,)), ((), ())),
        preferred_element_type=jnp.float32)

    @pl.when(k == pl.num_programs(2) - 1)
    def _():
        b = bmu_ref[...] + bsig_ref[...] * beps_ref[...]          # [1, tn] f32
        o_ref[...] = (acc_ref[...] + b).astype(o_ref.dtype)


def _plain_linear_kernel(x_ref, wmu_ref, bmu_ref, o_ref, acc_ref):
    """Eval-mode tile: plain x @ mu.T + bias_mu (no sigma/epsilon streamed)."""
    k = pl.program_id(2)

    @pl.when(k == 0)
    def _():
        acc_ref[...] = jnp.zeros_like(acc_ref)

    acc_ref[...] += lax.dot_general(
        x_ref[...], wmu_ref[...],
        dimension_numbers=(((1,), (1,)), ((), ())),
        preferred_element_type=jnp.float32)

    @pl.when(k == pl.num_programs(2) - 1)
    def _():
        o_ref[...] = (acc_ref[...] + bmu_ref[...]).astype(o_ref.dtype)


# ------------------------------------------------------------------ packing

class NoisyLinearParams(NamedTuple):
    wmu: jax.Array    # [Np, Kp] bf16
    wsig: jax.Array   # [Np, Kp] bf16
    weps: jax.Array   # [Np, Kp] bf16
    bmu: jax.Array    # [1, Np]  f32
    bsig: jax.Array   # [1, Np]  f32
    beps: jax.Array   # [1, Np]  f32


class NoisyLinearConfig(NamedTuple):   # hashable -> usable as a static arg
    in_features: int
    out_features: int
    tn: int
    tk: int


def pack_noisy_linear_params(weight_mu, weight_sigma, weight_epsilon,
                             bias_mu, bias_sigma, bias_epsilon,
                             *, tn_cap=512, tk_cap=512):
    """Pad + cast parameters ONCE (call after init / reset_noise), so the
    per-forward wrapper only pads x."""
    N, K = weight_mu.shape
    tn = _balanced_tile(N, tn_cap, 128)
    tk = _balanced_tile(K, tk_cap, 128)
    Np, Kp = _round_up(N, tn), _round_up(K, tk)

    def padw(a):
        return _pad2(a.astype(jnp.bfloat16), Np, Kp)

    def padb(a):
        return _pad2(a.reshape(1, N).astype(jnp.float32), 1, Np)

    params = NoisyLinearParams(
        wmu=padw(weight_mu), wsig=padw(weight_sigma), weps=padw(weight_epsilon),
        bmu=padb(bias_mu), bsig=padb(bias_sigma), beps=padb(bias_epsilon))
    config = NoisyLinearConfig(in_features=K, out_features=N, tn=tn, tk=tk)
    return params, config


# ------------------------------------------------------------------ forward

@functools.partial(jax.jit, static_argnames=("config", "training"))
def noisy_linear_forward(x, params, *, config, training=True):
    B, K = x.shape
    assert K == config.in_features
    N, tn, tk = config.out_features, config.tn, config.tk
    Np, Kp = params.wmu.shape

    # Batch tile: cap 512 (weights dominate VMEM; x/acc/out tiles are cheap),
    # balanced so a trailing tile isn't nearly empty, multiple of 16 for bf16.
    tm = _balanced_tile(B, 512, 16)
    Bp = _round_up(B, tm)

    xp = _pad2(x.astype(jnp.bfloat16), Bp, Kp)

    # (N, B, K): weight tiles stay resident across the B axis when Kp == tk;
    # K last (reduction axis), output block constant across it.
    grid = (Np // tn, Bp // tm, Kp // tk)

    x_spec = pl.BlockSpec((tm, tk), lambda n, b, k: (b, k))
    w_spec = pl.BlockSpec((tn, tk), lambda n, b, k: (n, k))
    b_spec = pl.BlockSpec((1, tn), lambda n, b, k: (0, n))   # leading dim == 1 (full-dim exemption)
    o_spec = pl.BlockSpec((tm, tn), lambda n, b, k: (b, n))

    cparams = pltpu.CompilerParams(
        dimension_semantics=("parallel", "parallel", "arbitrary"))

    if training:
        out_p = pl.pallas_call(
            _noisy_linear_kernel,
            out_shape=jax.ShapeDtypeStruct((Bp, Np), jnp.float32),
            grid_spec=pltpu.PrefetchScalarGridSpec(
                num_scalar_prefetch=0, grid=grid,
                in_specs=[x_spec, w_spec, w_spec, w_spec,
                          b_spec, b_spec, b_spec],
                out_specs=o_spec,
                scratch_shapes=[pltpu.VMEM((tm, tn), jnp.float32)]),
            compiler_params=cparams,
        )(xp, params.wmu, params.wsig, params.weps,
          params.bmu, params.bsig, params.beps)
    else:
        # Dedicated eval path: only mu / bias_mu are DMA'd (no dead operands).
        out_p = pl.pallas_call(
            _plain_linear_kernel,
            out_shape=jax.ShapeDtypeStruct((Bp, Np), jnp.float32),
            grid_spec=pltpu.PrefetchScalarGridSpec(
                num_scalar_prefetch=0, grid=grid,
                in_specs=[x_spec, w_spec, b_spec],
                out_specs=o_spec,
                scratch_shapes=[pltpu.VMEM((tm, tn), jnp.float32)]),
            compiler_params=cparams,
        )(xp, params.wmu, params.bmu)

    return out_p[:B, :N]


# ------------------------------------------------------------------ init

def init_noisy_linear_params(key, in_features, out_features, sigma_init=0.05):
    """Deterministic init matching NoisyLinear.reset_parameters / reset_noise."""
    k_wmu, k_bmu, k_weps, k_beps = jax.random.split(key, 4)
    mu_range = 1.0 / math.sqrt(in_features)
    weight_mu = jax.random.uniform(
        k_wmu, (out_features, in_features), jnp.float32, -mu_range, mu_range)
    weight_sigma = jnp.full((out_features, in_features), sigma_init, jnp.float32)
    weight_epsilon = jax.random.normal(k_weps, (out_features, in_features), jnp.float32)
    bias_mu = jax.random.uniform(
        k_bmu, (out_features,), jnp.float32, -mu_range, mu_range)
    bias_sigma = jnp.full((out_features,), sigma_init, jnp.float32)
    bias_epsilon = jax.random.normal(k_beps, (out_features,), jnp.float32)
    return (weight_mu, weight_sigma, weight_epsilon,
            bias_mu, bias_sigma, bias_epsilon)


if __name__ == "__main__":
    key = jax.random.PRNGKey(0)
    k_params, k_x = jax.random.split(key)

    batch, in_features, out_features = 8, 32, 64
    (weight_mu, weight_sigma, weight_epsilon,
     bias_mu, bias_sigma, bias_epsilon) = init_noisy_linear_params(
        k_params, in_features, out_features)

    # One-time pack: pad + cast to bf16 (done at parameter / reset_noise time).
    params, config = pack_noisy_linear_params(
        weight_mu, weight_sigma, weight_epsilon,
        bias_mu, bias_sigma, bias_epsilon)

    x = jax.random.normal(k_x, (batch, in_features), jnp.float32)

    # Training-mode forward (noisy weights), matching nn.Module default.
    out = noisy_linear_forward(x, params, config=config, training=True)
    out = jax.block_until_ready(out)

    # Pure-JAX f32 reference (bf16 params/operands -> relaxed tolerance).
    w_ref = weight_mu + weight_sigma * weight_epsilon
    b_ref = bias_mu + bias_sigma * bias_epsilon
    ref = x @ w_ref.T + b_ref
    assert out.shape == (batch, out_features)
    assert jnp.allclose(out, ref, atol=3e-2, rtol=3e-2), "mismatch vs reference"

    # Eval-mode forward (no noise, dedicated plain-linear kernel).
    out_eval = noisy_linear_forward(x, params, config=config, training=False)
    out_eval = jax.block_until_ready(out_eval)
    ref_eval = x @ weight_mu.T + bias_mu
    assert jnp.allclose(out_eval, ref_eval, atol=3e-2, rtol=3e-2), "eval mismatch"

    print("KERNEL_OK")
</pallas_src>

<mosaic_0001>
module attributes {stable_mosaic.version = 11 : i64} {
  func.func @_noisy_linear_kernel(%arg0: i32, %arg1: i32, %arg2: i32, %arg3: memref<16x128xbf16, #tpu.memory_space<vmem>>, %arg4: memref<128x128xbf16, #tpu.memory_space<vmem>>, %arg5: memref<128x128xbf16, #tpu.memory_space<vmem>>, %arg6: memref<128x128xbf16, #tpu.memory_space<vmem>>, %arg7: memref<1x128xf32, #tpu.memory_space<vmem>>, %arg8: memref<1x128xf32, #tpu.memory_space<vmem>>, %arg9: memref<1x128xf32, #tpu.memory_space<vmem>>, %arg10: memref<16x128xf32, #tpu.memory_space<vmem>>, %arg11: memref<16x128xf32, #tpu.memory_space<vmem>>) attributes {dimension_semantics = [#tpu.dimension_semantics<parallel>, #tpu.dimension_semantics<parallel>, #tpu.dimension_semantics<arbitrary>], iteration_bounds = array<i64: 1, 1, 1>, scalar_prefetch = 0 : i64, scratch_operands = 1 : i64, tpu.core_type = #tpu.core_type<tc>, window_params = [{transform_indices = @transform_0, window_bounds = array<i64: 16, 128>}, {transform_indices = @transform_1, window_bounds = array<i64: 128, 128>}, {transform_indices = @transform_2, window_bounds = array<i64: 128, 128>}, {transform_indices = @transform_3, window_bounds = array<i64: 128, 128>}, {transform_indices = @transform_4, window_bounds = array<i64: 1, 128>}, {transform_indices = @transform_5, window_bounds = array<i64: 1, 128>}, {transform_indices = @transform_6, window_bounds = array<i64: 1, 128>}, {transform_indices = @transform_7, window_bounds = array<i64: 16, 128>}]} {
    %c0_i32 = arith.constant 0 : i32
    %0 = arith.cmpi eq, %arg2, %c0_i32 : i32
    %1 = arith.extui %0 : i1 to i32
    %c0_i32_0 = arith.constant 0 : i32
    %2 = arith.cmpi ne, %1, %c0_i32_0 : i32
    scf.if %2 {
      %cst_14 = arith.constant 0.000000e+00 : f32
      %16 = vector.broadcast %cst_14 : f32 to vector<16x128xf32>
      %c0_15 = arith.constant 0 : index
      %c0_16 = arith.constant 0 : index
      %17 = vector.load %arg11[%c0_15, %c0_16] : memref<16x128xf32, #tpu.memory_space<vmem>>, vector<16x128xf32>
      tpu.vector_store %arg11[%c0_15, %c0_16], %16 {strides = array<i32>} : memref<16x128xf32, #tpu.memory_space<vmem>>, vector<16x128xf32>,
    } else {
    }
    %c0 = arith.constant 0 : index
    %c0_1 = arith.constant 0 : index
    %3 = vector.load %arg4[%c0, %c0_1] : memref<128x128xbf16, #tpu.memory_space<vmem>>, vector<128x128xbf16>
    %c0_2 = arith.constant 0 : index
    %c0_3 = arith.constant 0 : index
    %4 = vector.load %arg5[%c0_2, %c0_3] : memref<128x128xbf16, #tpu.memory_space<vmem>>, vector<128x128xbf16>
    %c0_4 = arith.constant 0 : index
    %c0_5 = arith.constant 0 : index
    %5 = vector.load %arg6[%c0_4, %c0_5] : memref<128x128xbf16, #tpu.memory_space<vmem>>, vector<128x128xbf16>
    %6 = arith.mulf %4, %5 : vector<128x128xbf16>
    %7 = arith.addf %3, %6 : vector<128x128xbf16>
    %c0_6 = arith.constant 0 : index
    %c0_7 = arith.constant 0 : index
    %8 = vector.load %arg11[%c0_6, %c0_7] : memref<16x128xf32, #tpu.memory_space<vmem>>, vector<16x128xf32>
    %c0_8 = arith.constant 0 : index
    %c0_9 = arith.constant 0 : index
    %9 = vector.load %arg3[%c0_8, %c0_9] : memref<16x128xbf16, #tpu.memory_space<vmem>>, vector<16x128xbf16>
    %cst = arith.constant dense<0.000000e+00> : vector<16x128xf32>
    %10 = tpu.matmul %9, %7, %cst {dimension_numbers = #tpu.dot_dimension_numbers<[1], [1], [0], [0], [0, 0, 1, 0], [], []>} : vector<16x128xbf16>, vector<128x128xbf16>, vector<16x128xf32> -> vector<16x128xf32>
    %11 = arith.addf %8, %10 : vector<16x128xf32>
    %c0_10 = arith.constant 0 : index
    %c0_11 = arith.constant 0 : index
    %12 = vector.load %arg11[%c0_10, %c0_11] : memref<16x128xf32, #tpu.memory_space<vmem>>, vector<16x128xf32>
    tpu.vector_store %arg11[%c0_10, %c0_11], %11 {strides = array<i32>} : memref<16x128xf32, #tpu.memory_space<vmem>>, vector<16x128xf32>,
    %c0_i32_12 = arith.constant 0 : i32
    %13 = arith.cmpi eq, %arg2, %c0_i32_12 : i32
    %14 = arith.extui %13 : i1 to i32
    %c0_i32_13 = arith.constant 0 : i32
    %15 = arith.cmpi ne, %14, %c0_i32_13 : i32
    scf.if %15 {
      %c0_14 = arith.constant 0 : index
      %c0_15 = arith.constant 0 : index
      %16 = vector.load %arg7[%c0_14, %c0_15] : memref<1x128xf32, #tpu.memory_space<vmem>>, vector<1x128xf32>
      %c0_16 = arith.constant 0 : index
      %c0_17 = arith.constant 0 : index
      %17 = vector.load %arg8[%c0_16, %c0_17] : memref<1x128xf32, #tpu.memory_space<vmem>>, vector<1x128xf32>
      %c0_18 = arith.constant 0 : index
      %c0_19 = arith.constant 0 : index
      %18 = vector.load %arg9[%c0_18, %c0_19] : memref<1x128xf32, #tpu.memory_space<vmem>>, vector<1x128xf32>
      %19 = arith.mulf %17, %18 : vector<1x128xf32>
      %20 = arith.addf %16, %19 : vector<1x128xf32>
      %c0_20 = arith.constant 0 : index
      %c0_21 = arith.constant 0 : index
      %21 = vector.load %arg11[%c0_20, %c0_21] : memref<16x128xf32, #tpu.memory_space<vmem>>, vector<16x128xf32>
      %22 = vector.broadcast %20 : vector<1x128xf32> to vector<16x128xf32>
      %23 = arith.addf %21, %22 : vector<16x128xf32>
      %c0_22 = arith.constant 0 : index
      %c0_23 = arith.constant 0 : index
      %24 = vector.load %arg10[%c0_22, %c0_23] : memref<16x128xf32, #tpu.memory_space<vmem>>, vector<16x128xf32>
      tpu.vector_store %arg10[%c0_22, %c0_23], %23 {strides = array<i32>} : memref<16x128xf32, #tpu.memory_space<vmem>>, vector<16x128xf32>,
    } else {
    }
    return
  }
  func.func @transform_0(%arg0: i32, %arg1: i32, %arg2: i32) -> (i32, i32) {
    %c0_i32 = arith.constant 0 : i32
    return %arg1, %arg2 : i32, i32
  }
  func.func @transform_1(%arg0: i32, %arg1: i32, %arg2: i32) -> (i32, i32) {
    %c0_i32 = arith.constant 0 : i32
    return %arg0, %arg2 : i32, i32
  }
  func.func @transform_2(%arg0: i32, %arg1: i32, %arg2: i32) -> (i32, i32) {
    %c0_i32 = arith.constant 0 : i32
    return %arg0, %arg2 : i32, i32
  }
  func.func @transform_3(%arg0: i32, %arg1: i32, %arg2: i32) -> (i32, i32) {
    %c0_i32 = arith.constant 0 : i32
    return %arg0, %arg2 : i32, i32
  }
  func.func @transform_4(%arg0: i32, %arg1: i32, %arg2: i32) -> (i32, i32) {
    %c0_i32 = arith.constant 0 : i32
    %c0_i32_0 = arith.constant 0 : i32
    return %c0_i32, %arg0 : i32, i32
  }
  func.func @transform_5(%arg0: i32, %arg1: i32, %arg2: i32) -> (i32, i32) {
    %c0_i32 = arith.constant 0 : i32
    %c0_i32_0 = arith.constant 0 : i32
    return %c0_i32, %arg0 : i32, i32
  }
  func.func @transform_6(%arg0: i32, %arg1: i32, %arg2: i32) -> (i32, i32) {
    %c0_i32 = arith.constant 0 : i32
    %c0_i32_0 = arith.constant 0 : i32
    return %c0_i32, %arg0 : i32, i32
  }
  func.func @transform_7(%arg0: i32, %arg1: i32, %arg2: i32) -> (i32, i32) {
    %c0_i32 = arith.constant 0 : i32
    return %arg1, %arg0 : i32, i32
  }
}

</mosaic_0001>

<llo_original>
// kernel: noisy_linear_forward.1
$region0: #{noisy_linear_forward.1}
  #allocation0 [shape = 'u32[]', space=smem, size = 0x4, offset = 0x4, fixed_abs, tag = 'smem constant byte address 0x4 - core index']
  #allocation1 [shape = 'u32[144,128]{1,0:T(1,128)}', space=vmem, size = 0x12000, scoped, tag = 'internal scratch']
  #allocation2 [shape = 'f32[16,128]{1,0:T(8,128)}', space=vmem, size = 0x2000, scoped, tag = 'scratch operand']
  %s0 = inlined_call_operand.vmem [shape: bf16[16,128], index: 0, kind: input, shape index: {}]
  %s1 = inlined_call_operand.hbm [shape: bf16[128,128], index: 1, kind: input, shape index: {}]
  %s2 = inlined_call_operand.hbm [shape: bf16[128,128], index: 2, kind: input, shape index: {}]
  %s3 = inlined_call_operand.hbm [shape: bf16[128,128], index: 3, kind: input, shape index: {}]
  %s4 = inlined_call_operand.vmem [shape: f32[1,128], index: 4, kind: input, shape index: {}]
  %s5 = inlined_call_operand.vmem [shape: f32[1,128], index: 5, kind: input, shape index: {}]
  %s6 = inlined_call_operand.vmem [shape: f32[1,128], index: 6, kind: input, shape index: {}]
  %s7 = inlined_call_operand.vmem [shape: f32[16,128], index: 7, kind: output, shape index: {}]
  %s8 = sld [smem:[#allocation0]]
  $region58: #{noisy_linear_forward.1} parent=0
    _
  %s10 = ssub.s32 1, %s8
  %s11 = scalar_select 0, %s10, %s8
  $region1: #{noisy_linear_forward.1} parent=0
    #allocation3 [shape = 'u8[32768]{0}', space=vmem, size = 0x8000, scoped, tag = 'input window, operand 1, single buffered']
    #allocation4 [shape = 's32[1]{0}', space=sflag, size = 0x4, scoped, tag = 'scoped memory for noisy_linear_forward.1']
    #allocation5 [shape = 'u8[32768]{0}', space=vmem, size = 0x8000, scoped, tag = 'input window, operand 2, single buffered']
    #allocation6 [shape = 's32[1]{0}', space=sflag, size = 0x4, scoped, tag = 'scoped memory for noisy_linear_forward.1']
    #allocation7 [shape = 'u8[32768]{0}', space=vmem, size = 0x8000, scoped, tag = 'input window, operand 3, single buffered']
    %12 = vsyncpa [#allocation4], 0
    %13 = vsyncpa [#allocation6], 0
    // Predicated region
    $region2: #{noisy_linear_forward.1} parent=1 // pred_check
      _
    $region3: #{noisy_linear_forward.1} parent=1 // pred_check_branch
      %15 = sbr.rel (0) target = $region5
    $region4: #{noisy_linear_forward.1} parent=1 // pred_region
      _
    $region5: #{noisy_linear_forward.1} parent=1 // pred_fallthru
      _
    // Predicated region
    $region6: #{noisy_linear_forward.1} parent=1 // pred_check
      _
    $region7: #{noisy_linear_forward.1} parent=1 // pred_check_branch
      %17 = sbr.rel (0) target = $region9
    $region8: #{noisy_linear_forward.1} parent=1 // pred_region
      %s19 = ssub.s32 1024, 1024
      %20 = vsyncadd [#allocation4], %s19
      %s21 = sshll.u32 [#allocation3], 4
      %s22 = int_to_ptr.vmem [resolvable:$true] %s21
      %27 = dma.hbm_to_vmem [thread:$0]  %s1, 1024, %s22, [#allocation4], 64, 64, 4
    $region9: #{noisy_linear_forward.1} parent=1 // pred_fallthru
      _
    // Predicated region
    $region10: #{noisy_linear_forward.1} parent=1 // pred_check
      _
    $region11: #{noisy_linear_forward.1} parent=1 // pred_check_branch
      %29 = sbr.rel (0) target = $region13
    $region12: #{noisy_linear_forward.1} parent=1 // pred_region
      %s31 = ssub.s32 1024, 1024
      %32 = vsyncadd [#allocation6], %s31
      %s33 = sshll.u32 [#allocation5], 4
      %s34 = int_to_ptr.vmem [resolvable:$true] %s33
      %39 = dma.hbm_to_vmem [thread:$0]  %s2, 1024, %s34, [#allocation6], 64, 64, 4
    $region13: #{noisy_linear_forward.1} parent=1 // pred_fallthru
      _
    // Predicated region
    $region14: #{noisy_linear_forward.1} parent=1 // pred_check
      _
    $region15: #{noisy_linear_forward.1} parent=1 // pred_check_branch
      %41 = sbr.rel (0) target = $region17
    $region16: #{noisy_linear_forward.1} parent=1 // pred_region
      %s43 = ssub.s32 1024, 1024
      %44 = vsyncadd [#allocation6], %s43
      %s45 = sshll.u32 [#allocation7], 4
      %s46 = int_to_ptr.vmem [resolvable:$true] %s45
      %51 = dma.hbm_to_vmem [thread:$0]  %s3, 1024, %s46, [#allocation6], 64, 64, 4
    $region17: #{noisy_linear_forward.1} parent=1 // pred_fallthru
      _
    // Predicated region
    $region18: #{noisy_linear_forward.1} parent=1 // pred_check
      _
    $region19: #{noisy_linear_forward.1} parent=1 // pred_check_branch
      %53 = sbr.rel (0) target = $region21
    $region20: #{noisy_linear_forward.1} parent=1 // pred_region
      _
    $region21: #{noisy_linear_forward.1} parent=1 // pred_fallthru
      _
    // Predicated region
    $region22: #{noisy_linear_forward.1} parent=1 // pred_check
      _
    $region23: #{noisy_linear_forward.1} parent=1 // pred_check_branch
      %55 = sbr.rel (0) target = $region25
    $region24: #{noisy_linear_forward.1} parent=1 // pred_region
      _
    $region25: #{noisy_linear_forward.1} parent=1 // pred_fallthru
      _
    // Predicated region
    $region26: #{noisy_linear_forward.1} parent=1 // pred_check
      _
    $region27: #{noisy_linear_forward.1} parent=1 // pred_check_branch
      %57 = sbr.rel (0) target = $region29
    $region28: #{noisy_linear_forward.1} parent=1 // pred_region
      _
    $region29: #{noisy_linear_forward.1} parent=1 // pred_fallthru
      _
    // Predicated region
    $region30: #{noisy_linear_forward.1} parent=1 // pred_check
      _
    $region31: #{noisy_linear_forward.1} parent=1 // pred_check_branch
      %59 = sbr.rel (0) target = $region33
    $region32: #{noisy_linear_forward.1} parent=1 // pred_region
      %60 = dma.done [#allocation4], 1024
    $region33: #{noisy_linear_forward.1} parent=1 // pred_fallthru
      _
    // Predicated region
    $region34: #{noisy_linear_forward.1} parent=1 // pred_check
      _
    $region35: #{noisy_linear_forward.1} parent=1 // pred_check_branch
      %62 = sbr.rel (0) target = $region37
    $region36: #{noisy_linear_forward.1} parent=1 // pred_region
      %63 = dma.done [#allocation6], 1024
    $region37: #{noisy_linear_forward.1} parent=1 // pred_fallthru
      _
    // Predicated region
    $region38: #{noisy_linear_forward.1} parent=1 // pred_check
      _
    $region39: #{noisy_linear_forward.1} parent=1 // pred_check_branch
      %65 = sbr.rel (0) target = $region41
    $region40: #{noisy_linear_forward.1} parent=1 // pred_region
      %66 = dma.done [#allocation6], 1024
    $region41: #{noisy_linear_forward.1} parent=1 // pred_fallthru
      _
    %p68 = scmp.eq.s32.totalorder 0, 0
    // Predicated region
    $region42: #{noisy_linear_forward.1} parent=1 // pred_check
      %p69 = pneg %p68
    $region43: #{noisy_linear_forward.1} parent=1 // pred_check_branch
      %71 = sbr.rel (%p69) target = $region45
    $region44: #{noisy_linear_forward.1} parent=1 // pred_region
      %72 = vst [vmem:[#allocation2] sm:$0xff] 0.0
      %73 = vst [vmem:[#allocation2 + $0x8] sm:$0xff] 0.0
    $region45: #{noisy_linear_forward.1} parent=1 // pred_fallthru
      _
    %v74 = vld [vmem:[#allocation3] sm:$0xf]
    %v75 = vld [vmem:[#allocation3 + $0x4] sm:$0xf]
    %v76 = vld [vmem:[#allocation3 + $0x8] sm:$0xf]
    %v77 = vld [vmem:[#allocation3 + $0xc] sm:$0xf]
    %v78 = vld [vmem:[#allocation3 + $0x10] sm:$0xf]
    %v79 = vld [vmem:[#allocation3 + $0x14] sm:$0xf]
    %v80 = vld [vmem:[#allocation3 + $0x18] sm:$0xf]
    %v81 = vld [vmem:[#allocation3 + $0x1c] sm:$0xf]
    %v82 = vld [vmem:[#allocation3 + $0x20] sm:$0xf]
    %v83 = vld [vmem:[#allocation3 + $0x24] sm:$0xf]
    %v84 = vld [vmem:[#allocation3 + $0x28] sm:$0xf]
    %v85 = vld [vmem:[#allocation3 + $0x2c] sm:$0xf]
    %v86 = vld [vmem:[#allocation3 + $0x30] sm:$0xf]
    %v87 = vld [vmem:[#allocation3 + $0x34] sm:$0xf]
    %v88 = vld [vmem:[#allocation3 + $0x38] sm:$0xf]
    %v89 = vld [vmem:[#allocation3 + $0x3c] sm:$0xf]
    %v90 = vld [vmem:[#allocation5] sm:$0xf]
    %v91 = vld [vmem:[#allocation5 + $0x4] sm:$0xf]
    %v92 = vld [vmem:[#allocation5 + $0x8] sm:$0xf]
    %v93 = vld [vmem:[#allocation5 + $0xc] sm:$0xf]
    %v94 = vld [vmem:[#allocation5 + $0x10] sm:$0xf]
    %v95 = vld [vmem:[#allocation5 + $0x14] sm:$0xf]
    %v96 = vld [vmem:[#allocation5 + $0x18] sm:$0xf]
    %v97 = vld [vmem:[#allocation5 + $0x1c] sm:$0xf]
    %v98 = vld [vmem:[#allocation5 + $0x20] sm:$0xf]
    %v99 = vld [vmem:[#allocation5 + $0x24] sm:$0xf]
    %v100 = vld [vmem:[#allocation5 + $0x28] sm:$0xf]
    %v101 = vld [vmem:[#allocation5 + $0x2c] sm:$0xf]
    %v102 = vld [vmem:[#allocation5 + $0x30] sm:$0xf]
    %v103 = vld [vmem:[#allocation5 + $0x34] sm:$0xf]
    %v104 = vld [vmem:[#allocation5 + $0x38] sm:$0xf]
    %v105 = vld [vmem:[#allocation5 + $0x3c] sm:$0xf]
    %v106 = vld [vmem:[#allocation7] sm:$0xf]
    %v107 = vld [vmem:[#allocation7 + $0x4] sm:$0xf]
    %v108 = vld [vmem:[#allocation7 + $0x8] sm:$0xf]
    %v109 = vld [vmem:[#allocation7 + $0xc] sm:$0xf]
    %v110 = vld [vmem:[#allocation7 + $0x10] sm:$0xf]
    %v111 = vld [vmem:[#allocation7 + $0x14] sm:$0xf]
    %v112 = vld [vmem:[#allocation7 + $0x18] sm:$0xf]
    %v113 = vld [vmem:[#allocation7 + $0x1c] sm:$0xf]
    %v114 = vld [vmem:[#allocation7 + $0x20] sm:$0xf]
    %v115 = vld [vmem:[#allocation7 + $0x24] sm:$0xf]
    %v116 = vld [vmem:[#allocation7 + $0x28] sm:$0xf]
    %v117 = vld [vmem:[#allocation7 + $0x2c] sm:$0xf]
    %v118 = vld [vmem:[#allocation7 + $0x30] sm:$0xf]
    %v119 = vld [vmem:[#allocation7 + $0x34] sm:$0xf]
    %v120 = vld [vmem:[#allocation7 + $0x38] sm:$0xf]
    %v121 = vld [vmem:[#allocation7 + $0x3c] sm:$0xf]
    %v122 = vmul.bf16 %v90, %v106
    %v123 = vmul.bf16 %v91, %v107
    %v124 = vmul.bf16 %v92, %v108
    %v125 = vmul.bf16 %v93, %v109
    %v126 = vmul.bf16 %v94, %v110
    %v127 = vmul.bf16 %v95, %v111
    %v128 = vmul.bf16 %v96, %v112
    %v129 = vmul.bf16 %v97, %v113
    %v130 = vmul.bf16 %v98, %v114
    %v131 = vmul.bf16 %v99, %v115
    %v132 = vmul.bf16 %v100, %v116
    %v133 = vmul.bf16 %v101, %v117
    %v134 = vmul.bf16 %v102, %v118
    %v135 = vmul.bf16 %v103, %v119
    %v136 = vmul.bf16 %v104, %v120
    %v137 = vmul.bf16 %v105, %v121
    %v138 = vadd.bf16 %v74, %v122
    %v139 = vadd.bf16 %v75, %v123
    %v140 = vadd.bf16 %v76, %v124
    %v141 = vadd.bf16 %v77, %v125
    %v142 = vadd.bf16 %v78, %v126
    %v143 = vadd.bf16 %v79, %v127
    %v144 = vadd.bf16 %v80, %v128
    %v145 = vadd.bf16 %v81, %v129
    %v146 = vadd.bf16 %v82, %v130
    %v147 = vadd.bf16 %v83, %v131
    %v148 = vadd.bf16 %v84, %v132
    %v149 = vadd.bf16 %v85, %v133
    %v150 = vadd.bf16 %v86, %v134
    %v151 = vadd.bf16 %v87, %v135
    %v152 = vadd.bf16 %v88, %v136
    %v153 = vadd.bf16 %v89, %v137
    %v154 = vld [vmem:[#allocation2] sm:$0xff]
    %v155 = vld [vmem:[#allocation2 + $0x8] sm:$0xff]
    %v156 = vld [vmem:[%s0] sm:$0xf]
    %v157 = vld [vmem:[%s0 + $0x4] sm:$0xf]
    %v160 = vunpack.c.l.b16 %v156
    %v161 = vunpack.c.l.b16 %v157
    %v162 = vpack.c.b16 %v161, %v160
    %v180 = vunpack.c.l.b16 %v138
    %v181 = vunpack.c.l.b16 %v139
    %v182 = vunpack.c.l.b16 %v140
    %v183 = vunpack.c.l.b16 %v141
    %v184 = vunpack.c.l.b16 %v142
    %v185 = vunpack.c.l.b16 %v143
    %v186 = vunpack.c.l.b16 %v144
    %v187 = vunpack.c.l.b16 %v145
    %v188 = vunpack.c.l.b16 %v146
    %v189 = vunpack.c.l.b16 %v147
    %v190 = vunpack.c.l.b16 %v148
    %v191 = vunpack.c.l.b16 %v149
    %v192 = vunpack.c.l.b16 %v150
    %v193 = vunpack.c.l.b16 %v151
    %v194 = vunpack.c.l.b16 %v152
    %v195 = vunpack.c.l.b16 %v153
    %v196 = vpack.c.b16 %v181, %v180
    %v197 = vpack.c.b16 %v183, %v182
    %v198 = vpack.c.b16 %v185, %v184
    %v199 = vpack.c.b16 %v187, %v186
    %v200 = vpack.c.b16 %v189, %v188
    %v201 = vpack.c.b16 %v191, %v190
    %v202 = vpack.c.b16 %v193, %v192
    %v203 = vpack.c.b16 %v195, %v194
    %212 = vmatprep.subr.bf16.mxu0 0
    %213 = vmatpush1.bf16.xpose.msra.mxu0 %v196
    %214 = vmatprep.subr.bf16.mxu0 0
    %215 = vmatpush1.bf16.xpose.msra.mxu0 %v197
    %216 = vmatprep.subr.bf16.mxu0 0
    %217 = vmatpush1.bf16.xpose.msra.mxu0 %v198
    %218 = vmatprep.subr.bf16.mxu0 0
    %219 = vmatpush1.bf16.xpose.msra.mxu0 %v199
    %220 = vmatprep.subr.bf16.mxu0 0
    %221 = vmatpush1.bf16.xpose.msra.mxu0 %v200
    %222 = vmatprep.subr.bf16.mxu0 0
    %223 = vmatpush1.bf16.xpose.msra.mxu0 %v201
    %224 = vmatprep.subr.bf16.mxu0 0
    %225 = vmatpush1.bf16.xpose.msra.mxu0 %v202
    %226 = vmatprep.subr.bf16.mxu0 0
    %227 = vmatpush1.bf16.xpose.msra.mxu0 %v203
    %228 = vmatprep.subr.bf16.mxu0 0
    %229 = vmatpush1.bf16.xpose.msra.mxu0 0
    %230 = vmatprep.subr.bf16.mxu0 0
    %231 = vmatpush1.bf16.xpose.msra.mxu0 0
    %232 = vmatprep.subr.bf16.mxu0 0
    %233 = vmatpush1.bf16.xpose.msra.mxu0 0
    %234 = vmatprep.subr.bf16.mxu0 0
    %235 = vmatpush1.bf16.xpose.msra.mxu0 0
    %236 = vmatprep.subr.bf16.mxu0 0
    %237 = vmatpush1.bf16.xpose.msra.mxu0 0
    %238 = vmatprep.subr.bf16.mxu0 0
    %239 = vmatpush1.bf16.xpose.msra.mxu0 0
    %240 = vmatprep.subr.bf16.mxu0 0
    %241 = vmatpush1.bf16.xpose.msra.mxu0 0
    %242 = vmatprep.subr.bf16.mxu0 0
    %243 = vmatpush1.bf16.xpose.msra.mxu0 0
    %244 = vmatprep.mubr.bf16.mxu0 0
    %245 = vmatmul.mubr.bf16.gmra.mrb[0].mxu0 %v162
    %v246 = vpop.f32.mrb[0].mxu0
    %v247 = vadd.f32 0.0, %v246
    %v248 = vpop.f32.mrb[0].mxu0
    %v249 = vpop.f32.mrb[0].mxu0
    %v250 = vadd.f32 0.0, %v249
    %v251 = vpop.f32.mrb[0].mxu0
    %252 = vdwg.mxu0
    %v253 = vadd.f32 %v154, %v247
    %v254 = vadd.f32 %v155, %v250
    %255 = vst [vmem:[#allocation2] sm:$0xff] %v253
    %256 = vst [vmem:[#allocation2 + $0x8] sm:$0xff] %v254
    // Predicated region
    $region46: #{noisy_linear_forward.1} parent=1 // pred_check
      %p257 = pneg %p68
    $region47: #{noisy_linear_forward.1} parent=1 // pred_check_branch
      %259 = sbr.rel (%p257) target = $region49
    $region48: #{noisy_linear_forward.1} parent=1 // pred_region
      %v260 = vld [vmem:[%s4] sm:$0x1]
      %v261 = vld [vmem:[%s5] sm:$0x1]
      %v262 = vld [vmem:[%s6] sm:$0x1]
      %v263 = vmul.f32 %v261, %v262
      %v264 = vadd.f32 %v260, %v263
      %v265 = vld [vmem:[#allocation2] sm:$0xff]
      %v266 = vld [vmem:[#allocation2 + $0x8] sm:$0xff]
      %v268 = vlaneseq
      %v269 = vshrl.u32 %v268, 7
      %v270 = vsub.s32 0, %v269
      %v271 = vrot.slane %v264, %v270
      %v273 = vadd.f32 %v265, %v271
      %v274 = vadd.f32 %v266, %v271
      %275 = vst [vmem:[%s7] sm:$0xff] %v273
      %276 = vst [vmem:[%s7 + $0x8] sm:$0xff] %v274
    $region49: #{noisy_linear_forward.1} parent=1 // pred_fallthru
      _
    // Predicated region
    $region50: #{noisy_linear_forward.1} parent=1 // pred_check
      _
    $region51: #{noisy_linear_forward.1} parent=1 // pred_check_branch
      %278 = sbr.rel (0) target = $region53
    $region52: #{noisy_linear_forward.1} parent=1 // pred_region
      _
    $region53: #{noisy_linear_forward.1} parent=1 // pred_fallthru
      _
    // Predicated region
    $region54: #{noisy_linear_forward.1} parent=1 // pred_check
      _
    $region55: #{noisy_linear_forward.1} parent=1 // pred_check_branch
      %280 = sbr.rel (0) target = $region57
    $region56: #{noisy_linear_forward.1} parent=1 // pred_region
      _
    $region57: #{noisy_linear_forward.1} parent=1 // pred_fallthru
      _
    %281 = vsyncpa [#allocation4], 1
    %282 = vsyncpa [#allocation6], 1

</llo_original>
